<compile_context>
chip_gen: v5e
topology: v5e:2x2
jax: 0.10.0
libtpu: 0.0.40
codegen_flags: <defaults>
</compile_context>

<pallas_src>
import jax
import jax.numpy as jnp
from jax.experimental import pallas as pl
from jax.experimental.pallas import tpu as pltpu


# ----------------------------------------------------------------------------
# Pallas kernel: one lane tile of the whole-batch contraction + bias epilogue.
# ----------------------------------------------------------------------------
def _conv_logits_kernel(p_ref, w_ref, b_ref, o_ref):
    """p_ref: (K, TL)  im2col patches, K = 9*Cin (tap-major, cin-minor),
                       TL lanes = flattened (n, oy, ox) output positions (bf16).
    w_ref: (Cout, K)   conv weight with matching K ordering (bf16).
    b_ref: (Cout, 1)   conv bias (f32).
    o_ref: (Cout, TL)  output tile (lane-dense, batch-folded spatial)."""
    acc = jax.lax.dot_general(
        w_ref[...], p_ref[...],
        dimension_numbers=(((1,), (0,)), ((), ())),
        preferred_element_type=jnp.float32)
    o_ref[...] = (acc + b_ref[...]).astype(o_ref.dtype)


def conv_logits_forward(x_nchw, w_oihw, bias, *, stride=2, use_bf16=True,
                        lane_tile_max=1024):
    """x: (N, Cin, H, W) NCHW.  w: (Cout, Cin, 3, 3) OIHW.  bias: (Cout,).
    Returns (N, Cout, Ho, Wo) NCHW, matching nn.Conv2d(k=3, stride=2, pad=1)."""
    N, Cin, H, W = x_nchw.shape
    Cout = w_oihw.shape[0]
    Ho = (H + 2 - 3) // stride + 1
    Wo = (W + 2 - 3) // stride + 1
    M = Ho * Wo
    K = 9 * Cin
    L = N * M                          # batch-folded spatial (lane dim)
    out_dtype = x_nchw.dtype
    mm_dtype = jnp.bfloat16 if use_bf16 else x_nchw.dtype

    # ---- Wrapper-side layout plumbing (no compute hoisted) -----------------
    # SAME padding + strided im2col, then fold batch into the lane dimension:
    # patches_folded[k, n*M + m] = patch k of image n at output position m.
    xp = jnp.pad(x_nchw, ((0, 0), (0, 0), (1, 1), (1, 1)))        # padding=1
    taps = [xp[:, :, dy:dy + stride * Ho:stride,
                    dx:dx + stride * Wo:stride]                    # (N,Cin,Ho,Wo)
            for dy in range(3) for dx in range(3)]
    patches = (jnp.stack(taps, axis=1)          # (N, 9, Cin, Ho, Wo)
                  .reshape(N, K, M)             # K = (tap, cin)
                  .transpose(1, 0, 2)           # (K, N, M)
                  .reshape(K, L)                # lane dim = N*Ho*Wo
                  .astype(mm_dtype))
    w_t = (jnp.transpose(w_oihw, (0, 2, 3, 1))  # (Cout, 3, 3, Cin) -> same K order
              .reshape(Cout, K).astype(mm_dtype))
    b2 = bias.reshape(Cout, 1).astype(jnp.float32)

    # ---- Lane tiling: multiples of 128 (unmasked stores), capped for VMEM --
    # Per-tile VMEM (double-buffered patch block) = 2 * K * lane_tile * elt
    # (~1.2 MB at Cin=32, lane_tile=1024, bf16): comfortably below the v7x
    # 64 MiB physical and v5e 16 MiB default-scoped VMEM limits, so no
    # vmem_limit_bytes override is needed at these head sizes.
    L128 = pl.cdiv(L, 128) * 128
    lane_tile = min(L128, lane_tile_max)
    L_pad = pl.cdiv(L, lane_tile) * lane_tile
    if L_pad != L:
        patches = jnp.pad(patches, ((0, 0), (0, L_pad - L)))
    n_tiles = L_pad // lane_tile

    elt = jnp.dtype(mm_dtype).itemsize
    cost = pl.CostEstimate(
        flops=2 * Cout * K * L_pad,
        transcendentals=0,
        bytes_accessed=(K * L_pad * elt                 # patches
                        + Cout * K * elt                # weights
                        + Cout * 4                      # bias
                        + Cout * L_pad * jnp.dtype(out_dtype).itemsize))

    out = pl.pallas_call(
        _conv_logits_kernel,
        out_shape=jax.ShapeDtypeStruct((Cout, L_pad), out_dtype),
        grid=(n_tiles,),
        in_specs=[
            pl.BlockSpec((K, lane_tile), lambda t: (0, t)),
            pl.BlockSpec((Cout, K), lambda t: (0, 0)),
            pl.BlockSpec((Cout, 1), lambda t: (0, 0)),
        ],
        out_specs=pl.BlockSpec((Cout, lane_tile), lambda t: (0, t)),
        compiler_params=pltpu.CompilerParams(
            dimension_semantics=("parallel",)),
        cost_estimate=cost,
    )(patches, w_t, b2)

    # Unfold back to NCHW outside the kernel (pure reshape/transpose).
    out = out[:, :L].reshape(Cout, N, M).transpose(1, 0, 2)
    return out.reshape(N, Cout, Ho, Wo)


# ----------------------------------------------------------------------------
# Pure-JAX reference (correctness check for the Pallas kernel)
# ----------------------------------------------------------------------------
def _ref_conv_logits(x_nchw, w_oihw, bias, *, stride=2):
    y = jax.lax.conv_general_dilated(
        x_nchw, w_oihw, window_strides=(stride, stride),
        padding=((1, 1), (1, 1)),
        dimension_numbers=("NCHW", "OIHW", "NCHW"))
    return y + bias.reshape(1, -1, 1, 1)


if __name__ == "__main__":
    key = jax.random.PRNGKey(0)
    k_x, k_w, k_b = jax.random.split(key, 3)

    # Small shapes consistent with the module: Conv_logits(num_anchor_points=4,
    # signal_classes=2, feature_size=32) on a (2, 32, 16, 16) feature map.
    num_anchor_points, signal_classes, feature_size = 4, 2, 32
    N, H, W = 2, 16, 16
    Cout = num_anchor_points * signal_classes

    x = jax.random.normal(k_x, (N, feature_size, H, W), jnp.float32)
    w = (jax.random.normal(k_w, (Cout, feature_size, 3, 3), jnp.float32)
         / jnp.sqrt(9.0 * feature_size))
    b = 0.1 * jax.random.normal(k_b, (Cout,), jnp.float32)

    out = conv_logits_forward(x, w, b)
    out = jax.block_until_ready(out)

    ref = _ref_conv_logits(x, w, b)
    ref = jax.block_until_ready(ref)

    assert out.shape == (N, Cout, 8, 8), out.shape
    # bf16 MXU inputs with f32 accumulation: logits (O(1) magnitude) agree with
    # the f32 reference well within 2e-2.
    assert jnp.allclose(out, ref, atol=2e-2, rtol=2e-2), "mismatch vs reference"
    print("KERNEL_OK")
</pallas_src>

<mosaic_0001>
module attributes {stable_mosaic.version = 11 : i64} {
  func.func @_conv_logits_kernel(%arg0: i32, %arg1: memref<288x128xbf16, #tpu.memory_space<vmem>>, %arg2: memref<8x288xbf16, #tpu.memory_space<vmem>>, %arg3: memref<8x1xf32, #tpu.memory_space<vmem>>, %arg4: memref<8x128xf32, #tpu.memory_space<vmem>>) attributes {dimension_semantics = [#tpu.dimension_semantics<parallel>], iteration_bounds = array<i64: 1>, scalar_prefetch = 0 : i64, scratch_operands = 0 : i64, tpu.core_type = #tpu.core_type<tc>, window_params = [{transform_indices = @transform_0, window_bounds = array<i64: 288, 128>}, {pipeline_mode = #tpu.pipeline_mode<synchronous>, transform_indices = @transform_1, window_bounds = array<i64: 8, 288>}, {pipeline_mode = #tpu.pipeline_mode<synchronous>, transform_indices = @transform_2, window_bounds = array<i64: 8, 1>}, {transform_indices = @transform_3, window_bounds = array<i64: 8, 128>}]} {
    %c0 = arith.constant 0 : index
    %c0_0 = arith.constant 0 : index
    %0 = vector.load %arg2[%c0, %c0_0] : memref<8x288xbf16, #tpu.memory_space<vmem>>, vector<8x288xbf16>
    %c0_1 = arith.constant 0 : index
    %c0_2 = arith.constant 0 : index
    %1 = vector.load %arg1[%c0_1, %c0_2] : memref<288x128xbf16, #tpu.memory_space<vmem>>, vector<288x128xbf16>
    %cst = arith.constant dense<0.000000e+00> : vector<8x128xf32>
    %2 = tpu.matmul %0, %1, %cst {dimension_numbers = #tpu.dot_dimension_numbers<[1], [0], [0], [1], [0, 0, 1, 1], [], []>} : vector<8x288xbf16>, vector<288x128xbf16>, vector<8x128xf32> -> vector<8x128xf32>
    %c0_3 = arith.constant 0 : index
    %c0_4 = arith.constant 0 : index
    %3 = vector.load %arg3[%c0_3, %c0_4] : memref<8x1xf32, #tpu.memory_space<vmem>>, vector<8x1xf32>
    %4 = vector.broadcast %3 : vector<8x1xf32> to vector<8x128xf32>
    %5 = arith.addf %2, %4 : vector<8x128xf32>
    %c0_5 = arith.constant 0 : index
    %c0_6 = arith.constant 0 : index
    %6 = vector.load %arg4[%c0_5, %c0_6] : memref<8x128xf32, #tpu.memory_space<vmem>>, vector<8x128xf32>
    tpu.vector_store %arg4[%c0_5, %c0_6], %5 {strides = array<i32>} : memref<8x128xf32, #tpu.memory_space<vmem>>, vector<8x128xf32>,
    return
  }
  func.func @transform_0(%arg0: i32) -> (i32, i32) {
    %c0_i32 = arith.constant 0 : i32
    %c0_i32_0 = arith.constant 0 : i32
    return %c0_i32, %arg0 : i32, i32
  }
  func.func @transform_1(%arg0: i32) -> (i32, i32) {
    %c0_i32 = arith.constant 0 : i32
    %c0_i32_0 = arith.constant 0 : i32
    %c0_i32_1 = arith.constant 0 : i32
    return %c0_i32, %c0_i32_0 : i32, i32
  }
  func.func @transform_2(%arg0: i32) -> (i32, i32) {
    %c0_i32 = arith.constant 0 : i32
    %c0_i32_0 = arith.constant 0 : i32
    %c0_i32_1 = arith.constant 0 : i32
    return %c0_i32, %c0_i32_0 : i32, i32
  }
  func.func @transform_3(%arg0: i32) -> (i32, i32) {
    %c0_i32 = arith.constant 0 : i32
    %c0_i32_0 = arith.constant 0 : i32
    return %c0_i32, %arg0 : i32, i32
  }
}

</mosaic_0001>

<llo_original>
// kernel: tpu_custom_call.1
$region0: #{tpu_custom_call.1}
  #allocation0 [shape = 'u32[]', space=smem, size = 0x4, offset = 0x4, fixed_abs, tag = 'smem constant byte address 0x4 - core index']
  #allocation1 [shape = 'u32[72,128]{1,0:T(1,128)}', space=vmem, size = 0x9000, scoped, tag = 'internal scratch']
  %s0 = inlined_call_operand.hbm [shape: bf16[288,128], index: 0, kind: input, shape index: {}]
  %s1 = inlined_call_operand.hbm [shape: bf16[8,288], index: 1, kind: input, shape index: {}]
  %s2 = inlined_call_operand.vmem [shape: f32[8,1], index: 2, kind: input, shape index: {}]
  %s3 = inlined_call_operand.hbm [shape: f32[8,128], index: 3, kind: output, shape index: {}]
  %s4 = sld [smem:[#allocation0]]
  $region30: #{tpu_custom_call.1} parent=0
    _
  %s6 = ssub.s32 1, %s4
  %s7 = scalar_select 0, %s6, %s4
  $region1: #{tpu_custom_call.1} parent=0
    #allocation2 [shape = 'u8[73728]{0}', space=vmem, size = 0x12000, scoped, tag = 'input window, operand 0, single buffered']
    #allocation3 [shape = 's32[1]{0}', space=sflag, size = 0x4, scoped, tag = 'scoped memory for tpu_custom_call.1']
    #allocation4 [shape = 's32[1]{0}', space=sflag, size = 0x4, scoped, tag = 'scoped memory for tpu_custom_call.1']
    #allocation5 [shape = 'u8[6144]{0}', space=vmem, size = 0x1800, scoped, tag = 'input window, operand 1, single buffered']
    #allocation6 [shape = 's32[1]{0}', space=sflag, size = 0x4, scoped, tag = 'scoped memory for tpu_custom_call.1']
    #allocation7 [shape = 'u8[4096]{0}', space=vmem, size = 0x1000, scoped, tag = 'output window, operand 0, single buffered']
    %8 = vsyncpa [#allocation3], 0
    %9 = vsyncpa [#allocation6], 0
    %10 = vsyncpa [#allocation4], 0
    // Predicated region
    $region2: #{tpu_custom_call.1} parent=1 // pred_check
      _
    $region3: #{tpu_custom_call.1} parent=1 // pred_check_branch
      %12 = sbr.rel (0) target = $region5
    $region4: #{tpu_custom_call.1} parent=1 // pred_region
      %14 = vsyncadd [#allocation3], 0
      %s15 = sshll.u32 %s0, 4
      %s16 = int_to_ptr.hbm [resolvable:$true] %s15
      %s17 = sshll.u32 [#allocation2], 4
      %s18 = int_to_ptr.vmem [resolvable:$true] %s17
      %23 = dma.hbm_to_vmem [thread:$0]  %s16, 2304, %s18, [#allocation3], 64, 64, 4
    $region5: #{tpu_custom_call.1} parent=1 // pred_fallthru
      _
    // Predicated region
    $region6: #{tpu_custom_call.1} parent=1 // pred_check
      _
    $region7: #{tpu_custom_call.1} parent=1 // pred_check_branch
      %25 = sbr.rel (0) target = $region9
    $region8: #{tpu_custom_call.1} parent=1 // pred_region
      %27 = vsyncadd [#allocation6], 0
      %s29 = sshll.u32 %s1, 4
      %s30 = int_to_ptr.hbm [resolvable:$true] %s29
      %s31 = sshll.u32 [#allocation5], 4
      %s32 = int_to_ptr.vmem [resolvable:$true] %s31
      %34 = dma.hbm_to_vmem [thread:$0]  %s30, 192, %s32, [#allocation6]
    $region9: #{tpu_custom_call.1} parent=1 // pred_fallthru
      _
    // Predicated region
    $region10: #{tpu_custom_call.1} parent=1 // pred_check
      _
    $region11: #{tpu_custom_call.1} parent=1 // pred_check_branch
      %36 = sbr.rel (0) target = $region13
    $region12: #{tpu_custom_call.1} parent=1 // pred_region
      _
    $region13: #{tpu_custom_call.1} parent=1 // pred_fallthru
      _
    // Predicated region
    $region14: #{tpu_custom_call.1} parent=1 // pred_check
      _
    $region15: #{tpu_custom_call.1} parent=1 // pred_check_branch
      %38 = sbr.rel (0) target = $region17
    $region16: #{tpu_custom_call.1} parent=1 // pred_region
      %40 = dma.done [#allocation3], 2304
    $region17: #{tpu_custom_call.1} parent=1 // pred_fallthru
      _
    // Predicated region
    $region18: #{tpu_custom_call.1} parent=1 // pred_check
      _
    $region19: #{tpu_custom_call.1} parent=1 // pred_check_branch
      %42 = sbr.rel (0) target = $region21
    $region20: #{tpu_custom_call.1} parent=1 // pred_region
      %44 = dma.done [#allocation6], 192
    $region21: #{tpu_custom_call.1} parent=1 // pred_fallthru
      _
    %v46 = vld [vmem:[#allocation5] sm:$0xff]
    %v47 = vld [vmem:[#allocation5 + $0x8] sm:$0xf]
    %v48 = vld [vmem:[#allocation2] sm:$0xf]
    %v49 = vld [vmem:[#allocation2 + $0x4] sm:$0xf]
    %v50 = vld [vmem:[#allocation2 + $0x8] sm:$0xf]
    %v51 = vld [vmem:[#allocation2 + $0xc] sm:$0xf]
    %v52 = vld [vmem:[#allocation2 + $0x10] sm:$0xf]
    %v53 = vld [vmem:[#allocation2 + $0x14] sm:$0xf]
    %v54 = vld [vmem:[#allocation2 + $0x18] sm:$0xf]
    %v55 = vld [vmem:[#allocation2 + $0x1c] sm:$0xf]
    %v56 = vld [vmem:[#allocation2 + $0x20] sm:$0xf]
    %v57 = vld [vmem:[#allocation2 + $0x24] sm:$0xf]
    %v58 = vld [vmem:[#allocation2 + $0x28] sm:$0xf]
    %v59 = vld [vmem:[#allocation2 + $0x2c] sm:$0xf]
    %v60 = vld [vmem:[#allocation2 + $0x30] sm:$0xf]
    %v61 = vld [vmem:[#allocation2 + $0x34] sm:$0xf]
    %v62 = vld [vmem:[#allocation2 + $0x38] sm:$0xf]
    %v63 = vld [vmem:[#allocation2 + $0x3c] sm:$0xf]
    %v64 = vld [vmem:[#allocation2 + $0x40] sm:$0xf]
    %v65 = vld [vmem:[#allocation2 + $0x44] sm:$0xf]
    %v66 = vld [vmem:[#allocation2 + $0x48] sm:$0xf]
    %v67 = vld [vmem:[#allocation2 + $0x4c] sm:$0xf]
    %v68 = vld [vmem:[#allocation2 + $0x50] sm:$0xf]
    %v69 = vld [vmem:[#allocation2 + $0x54] sm:$0xf]
    %v70 = vld [vmem:[#allocation2 + $0x58] sm:$0xf]
    %v71 = vld [vmem:[#allocation2 + $0x5c] sm:$0xf]
    %v72 = vld [vmem:[#allocation2 + $0x60] sm:$0xf]
    %v73 = vld [vmem:[#allocation2 + $0x64] sm:$0xf]
    %v74 = vld [vmem:[#allocation2 + $0x68] sm:$0xf]
    %v75 = vld [vmem:[#allocation2 + $0x6c] sm:$0xf]
    %v76 = vld [vmem:[#allocation2 + $0x70] sm:$0xf]
    %v77 = vld [vmem:[#allocation2 + $0x74] sm:$0xf]
    %v78 = vld [vmem:[#allocation2 + $0x78] sm:$0xf]
    %v79 = vld [vmem:[#allocation2 + $0x7c] sm:$0xf]
    %v80 = vld [vmem:[#allocation2 + $0x80] sm:$0xf]
    %v81 = vld [vmem:[#allocation2 + $0x84] sm:$0xf]
    %v82 = vld [vmem:[#allocation2 + $0x88] sm:$0xf]
    %v83 = vld [vmem:[#allocation2 + $0x8c] sm:$0xf]
    %v84 = vld [vmem:[%s2] sm:$0xff]
    %86 = vset.pattern.permute.xlu0 0
    %87 = vperm.xlu0 %86, %v84
    %v88 = vpop.permute.xlu0 %87
    %v92 = vunpack.c.l.b16 %v46
    %v93 = vunpack.c.h.b16 %v46
    %v94 = vunpack.c.l.b16 %v47
    %v95 = vpack.c.b16 %v92, %v92
    %v96 = vpack.c.b16 %v93, %v93
    %v97 = vpack.c.b16 %v94, %v94
    %v136 = vunpack.c.l.b16 %v48
    %v137 = vunpack.c.l.b16 %v49
    %v138 = vunpack.c.l.b16 %v50
    %v139 = vunpack.c.l.b16 %v51
    %v140 = vunpack.c.l.b16 %v52
    %v141 = vunpack.c.l.b16 %v53
    %v142 = vunpack.c.l.b16 %v54
    %v143 = vunpack.c.l.b16 %v55
    %v144 = vunpack.c.l.b16 %v56
    %v145 = vunpack.c.l.b16 %v57
    %v146 = vunpack.c.l.b16 %v58
    %v147 = vunpack.c.l.b16 %v59
    %v148 = vunpack.c.l.b16 %v60
    %v149 = vunpack.c.l.b16 %v61
    %v150 = vunpack.c.l.b16 %v62
    %v151 = vunpack.c.l.b16 %v63
    %v152 = vunpack.c.l.b16 %v64
    %v153 = vunpack.c.l.b16 %v65
    %v154 = vunpack.c.l.b16 %v66
    %v155 = vunpack.c.l.b16 %v67
    %v156 = vunpack.c.l.b16 %v68
    %v157 = vunpack.c.l.b16 %v69
    %v158 = vunpack.c.l.b16 %v70
    %v159 = vunpack.c.l.b16 %v71
    %v160 = vunpack.c.l.b16 %v72
    %v161 = vunpack.c.l.b16 %v73
    %v162 = vunpack.c.l.b16 %v74
    %v163 = vunpack.c.l.b16 %v75
    %v164 = vunpack.c.l.b16 %v76
    %v165 = vunpack.c.l.b16 %v77
    %v166 = vunpack.c.l.b16 %v78
    %v167 = vunpack.c.l.b16 %v79
    %v168 = vunpack.c.l.b16 %v80
    %v169 = vunpack.c.l.b16 %v81
    %v170 = vunpack.c.l.b16 %v82
    %v171 = vunpack.c.l.b16 %v83
    %v172 = vpack.c.b16 %v137, %v136
    %v173 = vpack.c.b16 %v139, %v138
    %v174 = vpack.c.b16 %v141, %v140
    %v175 = vpack.c.b16 %v143, %v142
    %v176 = vpack.c.b16 %v145, %v144
    %v177 = vpack.c.b16 %v147, %v146
    %v178 = vpack.c.b16 %v149, %v148
    %v179 = vpack.c.b16 %v151, %v150
    %v180 = vpack.c.b16 %v153, %v152
    %v181 = vpack.c.b16 %v155, %v154
    %v182 = vpack.c.b16 %v157, %v156
    %v183 = vpack.c.b16 %v159, %v158
    %v184 = vpack.c.b16 %v161, %v160
    %v185 = vpack.c.b16 %v163, %v162
    %v186 = vpack.c.b16 %v165, %v164
    %v187 = vpack.c.b16 %v167, %v166
    %v188 = vpack.c.b16 %v169, %v168
    %v189 = vpack.c.b16 %v171, %v170
    %vm208 = vcmask 261120
    %v210 = vsel %vm208, %v97, 0
    %212 = vmatpush.bf16.msra.mxu0 %v179
    %213 = vmatpush.bf16.msra.mxu0 %v178
    %214 = vmatpush.bf16.msra.mxu0 %v177
    %215 = vmatpush.bf16.msra.mxu0 %v176
    %216 = vmatpush.bf16.msra.mxu0 %v175
    %217 = vmatpush.bf16.msra.mxu0 %v174
    %218 = vmatpush.bf16.msra.mxu0 %v173
    %219 = vmatpush.bf16.msra.mxu0 %v172
    %220 = vmatmul.bf16.gmra.mxu0 %v95
    %v221 = vpop.f32.mrf.mxu0
    %v222 = vadd.f32 %v88, %v221
    %v223 = vpop.f32.mrf.mxu0
    %224 = vdwg.mxu0
    %225 = vmatpush.bf16.msra.mxu0 %v187
    %226 = vmatpush.bf16.msra.mxu0 %v186
    %227 = vmatpush.bf16.msra.mxu0 %v185
    %228 = vmatpush.bf16.msra.mxu0 %v184
    %229 = vmatpush.bf16.msra.mxu0 %v183
    %230 = vmatpush.bf16.msra.mxu0 %v182
    %231 = vmatpush.bf16.msra.mxu0 %v181
    %232 = vmatpush.bf16.msra.mxu0 %v180
    %233 = vmatmul.bf16.gmra.mxu0 %v96
    %v234 = vpop.f32.mrf.mxu0
    %v235 = vadd.f32 %v222, %v234
    %v236 = vpop.f32.mrf.mxu0
    %237 = vdwg.mxu0
    %238 = vmatpush.bf16.msra.mxu0 0
    %239 = vmatpush.bf16.msra.mxu0 0
    %240 = vmatpush.bf16.msra.mxu0 0
    %241 = vmatpush.bf16.msra.mxu0 0
    %242 = vmatpush.bf16.msra.mxu0 0
    %243 = vmatpush.bf16.msra.mxu0 0
    %244 = vmatpush.bf16.msra.mxu0 %v189
    %245 = vmatpush.bf16.msra.mxu0 %v188
    %246 = vmatmul.bf16.gmra.mxu0 %v210
    %v247 = vpop.f32.mrf.mxu0
    %v248 = vadd.f32 %v235, %v247
    %v249 = vpop.f32.mrf.mxu0
    %250 = vdwg.mxu0
    %251 = vst [vmem:[#allocation7] sm:$0xff] %v248
    // Predicated region
    $region22: #{tpu_custom_call.1} parent=1 // pred_check
      _
    $region23: #{tpu_custom_call.1} parent=1 // pred_check_branch
      %253 = sbr.rel (0) target = $region25
    $region24: #{tpu_custom_call.1} parent=1 // pred_region
      %255 = vsyncadd [#allocation4], 0
      %s257 = sshll.u32 [#allocation7], 4
      %s258 = int_to_ptr.vmem [resolvable:$true] %s257
      %s259 = sshll.u32 %s3, 4
      %s260 = int_to_ptr.hbm [resolvable:$true] %s259
      %262 = dma.vmem_to_hbm [thread:$0]  %s258, 128, %s260, [#allocation4]
    $region25: #{tpu_custom_call.1} parent=1 // pred_fallthru
      _
    // Predicated region
    $region26: #{tpu_custom_call.1} parent=1 // pred_check
      _
    $region27: #{tpu_custom_call.1} parent=1 // pred_check_branch
      %264 = sbr.rel (0) target = $region29
    $region28: #{tpu_custom_call.1} parent=1 // pred_region
      %266 = dma.done [#allocation4], 128
    $region29: #{tpu_custom_call.1} parent=1 // pred_fallthru
      _
    %267 = vsyncpa [#allocation3], 1
    %268 = vsyncpa [#allocation6], 1
    %269 = vsyncpa [#allocation4], 1

</llo_original>
